<compile_context>
chip_gen: v6e
topology: v6e:2x2x1
jax: 0.10.0
libtpu: 0.0.40
codegen_flags: <defaults>
</compile_context>

<pallas_src>
import jax
import jax.numpy as jnp
from jax.experimental import pallas as pl
from jax.experimental.pallas import tpu as pltpu

LN_EPS = 1e-5


def _layernorm(h, gamma, beta):
    mu = jnp.mean(h, axis=-1, keepdims=True)
    var = jnp.mean((h - mu) ** 2, axis=-1, keepdims=True)
    return (h - mu) * jax.lax.rsqrt(var + LN_EPS) * gamma + beta


def attn_aggr_kernel(x_ref, y_ref,
                     wc_ref, bc_ref,
                     w13_ref, b13_ref, g13_ref, be13_ref,
                     w2_ref, b2_ref,
                     w4_ref, b4_ref,
                     out_ref):
    # x_ref: [G, N, D] (G whole graphs), y_ref: [G, Dy], out_ref: [G, DP] (DP = lane-padded D)
    G, N, D = x_ref.shape
    H = w2_ref.shape[-1]

    # lin_c(y) for the whole block of G graphs (one small MXU pass instead of one per graph).
    yc = jnp.dot(y_ref[...].astype(jnp.bfloat16), wc_ref[...],
                 preferred_element_type=jnp.float32) + bc_ref[...]              # [G, D]
    xc = x_ref[...] + yc[:, None, :]                                            # [G, N, D] f32
    xc2 = xc.reshape(G * N, D).astype(jnp.bfloat16)                             # [G*N, D]

    # Fused first layer of gate_nn and nn: one [G*N, D] @ [D, 2H] MXU pass (2H = lane-dense 128).
    h = jnp.dot(xc2, w13_ref[...],
                preferred_element_type=jnp.float32) + b13_ref[...]              # [G*N, 2H]

    g13 = g13_ref[...]
    be13 = be13_ref[...]
    # gate branch: LayerNorm -> ReLU (f32)
    h1 = jnp.maximum(_layernorm(h[:, :H], g13[:, :H], be13[:, :H]), 0.0)        # [G*N, H]
    # feature branch: LayerNorm -> ReLU (f32)
    h3 = jnp.maximum(_layernorm(h[:, H:], g13[:, H:], be13[:, H:]), 0.0)        # [G*N, H]

    # Gate head Linear(H, 1): VPU multiply + lane reduction instead of a 1-lane MXU pass.
    gate = jnp.sum(h1 * w2_ref[...], axis=-1, keepdims=True) + b2_ref[...]      # [G*N, 1]

    # Feature head Linear(H, D), output padded to lane-dense DP columns.
    t = jnp.dot(h3.astype(jnp.bfloat16), w4_ref[...],
                preferred_element_type=jnp.float32) + b4_ref[...]               # [G*N, DP]
    DP = t.shape[-1]

    # Per-graph softmax over the N nodes (f32); approx reciprocal runs on the idle EUP slot.
    gate = gate.reshape(G, N, 1)
    m = jnp.max(gate, axis=1, keepdims=True)
    e = jnp.exp(gate - m)
    alpha = e * pl.reciprocal(jnp.sum(e, axis=1, keepdims=True), approx=True)   # [G, N, 1]

    # Attention-weighted sum over nodes (VPU multiply + cross-sublane reduce, kept in f32).
    out = jnp.sum(alpha * t.reshape(G, N, DP), axis=1)                          # [G, DP]
    out_ref[...] = out.astype(out_ref.dtype)


def attn_aggr(x, y, params, *, graphs_per_step=2):
    B, N, D = x.shape
    Dy = y.shape[-1]
    H = params["w1"].shape[-1]
    G = graphs_per_step
    assert B % G == 0, "batch must be divisible by graphs_per_step"
    nb = B // G

    # Pad the output-side embed dim to a lane-dense multiple of 128 (unmasked stores);
    # the wrapper slices back to D afterwards.
    DP = ((D + 127) // 128) * 128
    pad = DP - D
    bf16 = jnp.bfloat16

    wc = params["wc"].astype(bf16)                                          # [Dy, D]
    bc = params["bc"]                                                       # [1, D]
    # Fused first-layer weights / LN params of gate_nn and nn.
    w13 = jnp.concatenate([params["w1"], params["w3"]], axis=1).astype(bf16)  # [D, 2H]
    b13 = jnp.concatenate([params["b1"], params["b3"]], axis=1)               # [1, 2H]
    g13 = jnp.concatenate([params["g1"], params["g3"]], axis=1)               # [1, 2H]
    be13 = jnp.concatenate([params["be1"], params["be3"]], axis=1)            # [1, 2H]
    w2 = params["w2"].reshape(1, H)                                           # row-vector form
    b2 = params["b2"]                                                         # [1, 1]
    w4 = jnp.pad(params["w4"], ((0, 0), (0, pad))).astype(bf16)               # [H, DP]
    b4 = jnp.pad(params["b4"], ((0, 0), (0, pad)))                            # [1, DP]

    weights = [wc, bc, w13, b13, g13, be13, w2, b2, w4, b4]

    y3 = y.reshape(nb, G, Dy)

    def full_spec(arr):
        nd = arr.ndim
        return pl.BlockSpec(arr.shape, lambda b, _nd=nd: (0,) * _nd)

    out = pl.pallas_call(
        attn_aggr_kernel,
        out_shape=jax.ShapeDtypeStruct((nb, G, DP), x.dtype),
        grid=(nb,),
        in_specs=[
            pl.BlockSpec((G, N, D), lambda b: (b, 0, 0)),       # G whole graphs per step
            pl.BlockSpec((None, G, Dy), lambda b: (b, 0, 0)),   # matching G rows of y
        ] + [full_spec(w) for w in weights],
        out_specs=pl.BlockSpec((None, G, DP), lambda b: (b, 0, 0)),
        compiler_params=pltpu.CompilerParams(dimension_semantics=("parallel",)),
    )(x, y3, *weights)

    return out.reshape(B, DP)[:, :D]


def attn_aggr_reference(x, y, params):
    # Pure-JAX f32 reference with the original (unfused, unpadded) math.
    yc = y @ params["wc"] + params["bc"]                      # [B, D]
    xc = x + yc[:, None, :]                                    # [B, N, D]

    h1 = xc @ params["w1"] + params["b1"]
    h1 = jnp.maximum(_layernorm(h1, params["g1"], params["be1"]), 0.0)
    gate = h1 @ params["w2"] + params["b2"]                    # [B, N, 1]

    h3 = xc @ params["w3"] + params["b3"]
    h3 = jnp.maximum(_layernorm(h3, params["g3"], params["be3"]), 0.0)
    t = h3 @ params["w4"] + params["b4"]                       # [B, N, D]

    alpha = jax.nn.softmax(gate, axis=1)
    return jnp.sum(alpha * t, axis=1)                          # [B, D]


def make_params(key, D, H, Dy):
    ks = jax.random.split(key, 8)
    s = lambda fan_in: 1.0 / jnp.sqrt(fan_in)
    return {
        # lin_c: LazyLinear(Dy -> D)
        "wc": jax.random.uniform(ks[0], (Dy, D), jnp.float32, -s(Dy), s(Dy)),
        "bc": jax.random.uniform(ks[1], (1, D), jnp.float32, -s(Dy), s(Dy)),
        # gate_nn
        "w1": jax.random.uniform(ks[2], (D, H), jnp.float32, -s(D), s(D)),
        "b1": jax.random.uniform(ks[3], (1, H), jnp.float32, -s(D), s(D)),
        "g1": jnp.ones((1, H), jnp.float32),
        "be1": jnp.zeros((1, H), jnp.float32),
        "w2": jax.random.uniform(ks[4], (H, 1), jnp.float32, -s(H), s(H)),
        "b2": jax.random.uniform(ks[5], (1, 1), jnp.float32, -s(H), s(H)),
        # nn
        "w3": jax.random.uniform(ks[6], (D, H), jnp.float32, -s(D), s(D)),
        "b3": jnp.zeros((1, H), jnp.float32),
        "g3": jnp.ones((1, H), jnp.float32),
        "be3": jnp.zeros((1, H), jnp.float32),
        "w4": jax.random.uniform(ks[7], (H, D), jnp.float32, -s(H), s(H)),
        "b4": jnp.zeros((1, D), jnp.float32),
    }


if __name__ == "__main__":
    # 8 graphs of 16 nodes, embed_dim=32, hidden_dim=64, graph-feature dim 16.
    B, N, D, H, Dy = 8, 16, 32, 64, 16

    key = jax.random.PRNGKey(0)
    kx, ky, kp = jax.random.split(key, 3)
    x = jax.random.normal(kx, (B, N, D), jnp.float32)
    y = jax.random.normal(ky, (B, Dy), jnp.float32)
    params = make_params(kp, D, H, Dy)

    out = attn_aggr(x, y, params, graphs_per_step=2)   # grid of 4 parallel steps
    out = jax.block_until_ready(out)

    ref = attn_aggr_reference(x, y, params)
    assert out.shape == (B, D)
    assert jnp.allclose(out, ref, atol=2e-2, rtol=2e-2), "mismatch vs JAX reference"

    print("KERNEL_OK")
</pallas_src>

<mosaic_0001>
module attributes {stable_mosaic.version = 11 : i64} {
  func.func @attn_aggr_kernel(%arg0: i32, %arg1: memref<2x16x32xf32, #tpu.memory_space<vmem>>, %arg2: memref<1x2x16xf32, #tpu.memory_space<vmem>>, %arg3: memref<16x32xbf16, #tpu.memory_space<vmem>>, %arg4: memref<1x32xf32, #tpu.memory_space<vmem>>, %arg5: memref<32x128xbf16, #tpu.memory_space<vmem>>, %arg6: memref<1x128xf32, #tpu.memory_space<vmem>>, %arg7: memref<1x128xf32, #tpu.memory_space<vmem>>, %arg8: memref<1x128xf32, #tpu.memory_space<vmem>>, %arg9: memref<1x64xf32, #tpu.memory_space<vmem>>, %arg10: memref<1x1xf32, #tpu.memory_space<vmem>>, %arg11: memref<64x128xbf16, #tpu.memory_space<vmem>>, %arg12: memref<1x128xf32, #tpu.memory_space<vmem>>, %arg13: memref<1x2x128xf32, #tpu.memory_space<vmem>>) attributes {dimension_semantics = [#tpu.dimension_semantics<parallel>], iteration_bounds = array<i64: 4>, scalar_prefetch = 0 : i64, scratch_operands = 0 : i64, tpu.core_type = #tpu.core_type<tc>, window_params = [{transform_indices = @transform_0, window_bounds = array<i64: 2, 16, 32>}, {transform_indices = @transform_1, window_bounds = array<i64: 1, 2, 16>}, {pipeline_mode = #tpu.pipeline_mode<synchronous>, transform_indices = @transform_2, window_bounds = array<i64: 16, 32>}, {pipeline_mode = #tpu.pipeline_mode<synchronous>, transform_indices = @transform_3, window_bounds = array<i64: 1, 32>}, {pipeline_mode = #tpu.pipeline_mode<synchronous>, transform_indices = @transform_4, window_bounds = array<i64: 32, 128>}, {pipeline_mode = #tpu.pipeline_mode<synchronous>, transform_indices = @transform_5, window_bounds = array<i64: 1, 128>}, {pipeline_mode = #tpu.pipeline_mode<synchronous>, transform_indices = @transform_6, window_bounds = array<i64: 1, 128>}, {pipeline_mode = #tpu.pipeline_mode<synchronous>, transform_indices = @transform_7, window_bounds = array<i64: 1, 128>}, {pipeline_mode = #tpu.pipeline_mode<synchronous>, transform_indices = @transform_8, window_bounds = array<i64: 1, 64>}, {pipeline_mode = #tpu.pipeline_mode<synchronous>, transform_indices = @transform_9, window_bounds = array<i64: 1, 1>}, {pipeline_mode = #tpu.pipeline_mode<synchronous>, transform_indices = @transform_10, window_bounds = array<i64: 64, 128>}, {pipeline_mode = #tpu.pipeline_mode<synchronous>, transform_indices = @transform_11, window_bounds = array<i64: 1, 128>}, {transform_indices = @transform_12, window_bounds = array<i64: 1, 2, 128>}]} {
    %c0 = arith.constant 0 : index
    %c0_0 = arith.constant 0 : index
    %c0_1 = arith.constant 0 : index
    %0 = vector.load %arg2[%c0, %c0_0, %c0_1] : memref<1x2x16xf32, #tpu.memory_space<vmem>>, vector<1x2x16xf32>
    %1 = vector.shape_cast %0 : vector<1x2x16xf32> to vector<2x16xf32>
    %2 = arith.truncf %1 : vector<2x16xf32> to vector<2x16xbf16>
    %c0_2 = arith.constant 0 : index
    %c0_3 = arith.constant 0 : index
    %3 = vector.load %arg3[%c0_2, %c0_3] : memref<16x32xbf16, #tpu.memory_space<vmem>>, vector<16x32xbf16>
    %cst = arith.constant dense<0.000000e+00> : vector<2x32xf32>
    %4 = tpu.matmul %2, %3, %cst {dimension_numbers = #tpu.dot_dimension_numbers<[1], [0], [0], [1], [0, 0, 1, 1], [], []>} : vector<2x16xbf16>, vector<16x32xbf16>, vector<2x32xf32> -> vector<2x32xf32>
    %c0_4 = arith.constant 0 : index
    %c0_5 = arith.constant 0 : index
    %5 = vector.load %arg4[%c0_4, %c0_5] : memref<1x32xf32, #tpu.memory_space<vmem>>, vector<1x32xf32>
    %6 = vector.broadcast %5 : vector<1x32xf32> to vector<2x32xf32>
    %7 = arith.addf %4, %6 : vector<2x32xf32>
    %c0_6 = arith.constant 0 : index
    %c0_7 = arith.constant 0 : index
    %c0_8 = arith.constant 0 : index
    %8 = vector.load %arg1[%c0_6, %c0_7, %c0_8] : memref<2x16x32xf32, #tpu.memory_space<vmem>>, vector<2x16x32xf32>
    %9 = vector.shape_cast %7 : vector<2x32xf32> to vector<2x1x32xf32>
    %10 = vector.broadcast %9 : vector<2x1x32xf32> to vector<2x16x32xf32>
    %11 = arith.addf %8, %10 : vector<2x16x32xf32>
    %12 = vector.shape_cast %11 : vector<2x16x32xf32> to vector<32x32xf32>
    %13 = arith.truncf %12 : vector<32x32xf32> to vector<32x32xbf16>
    %c0_9 = arith.constant 0 : index
    %c0_10 = arith.constant 0 : index
    %14 = vector.load %arg5[%c0_9, %c0_10] : memref<32x128xbf16, #tpu.memory_space<vmem>>, vector<32x128xbf16>
    %cst_11 = arith.constant dense<0.000000e+00> : vector<32x128xf32>
    %15 = tpu.matmul %13, %14, %cst_11 {dimension_numbers = #tpu.dot_dimension_numbers<[1], [0], [0], [1], [0, 0, 1, 1], [], []>} : vector<32x32xbf16>, vector<32x128xbf16>, vector<32x128xf32> -> vector<32x128xf32>
    %c0_12 = arith.constant 0 : index
    %c0_13 = arith.constant 0 : index
    %16 = vector.load %arg6[%c0_12, %c0_13] : memref<1x128xf32, #tpu.memory_space<vmem>>, vector<1x128xf32>
    %17 = vector.broadcast %16 : vector<1x128xf32> to vector<32x128xf32>
    %18 = arith.addf %15, %17 : vector<32x128xf32>
    %c0_14 = arith.constant 0 : index
    %c0_15 = arith.constant 0 : index
    %19 = vector.load %arg7[%c0_14, %c0_15] : memref<1x128xf32, #tpu.memory_space<vmem>>, vector<1x128xf32>
    %c0_16 = arith.constant 0 : index
    %c0_17 = arith.constant 0 : index
    %20 = vector.load %arg8[%c0_16, %c0_17] : memref<1x128xf32, #tpu.memory_space<vmem>>, vector<1x128xf32>
    %21 = vector.extract_strided_slice %18 {offsets = [0, 0], sizes = [32, 64], strides = [1, 1]} : vector<32x128xf32> to vector<32x64xf32>
    %22 = vector.extract_strided_slice %19 {offsets = [0, 0], sizes = [1, 64], strides = [1, 1]} : vector<1x128xf32> to vector<1x64xf32>
    %23 = vector.extract_strided_slice %20 {offsets = [0, 0], sizes = [1, 64], strides = [1, 1]} : vector<1x128xf32> to vector<1x64xf32>
    %cst_18 = arith.constant dense<0.000000e+00> : vector<32xf32>
    %24 = vector.multi_reduction <add>, %21, %cst_18 [1] : vector<32x64xf32> to vector<32xf32>
    %25 = vector.shape_cast %24 : vector<32xf32> to vector<32x1xf32>
    %cst_19 = arith.constant 6.400000e+01 : f32
    %26 = vector.broadcast %cst_19 : f32 to vector<32x1xf32>
    %27 = arith.divf %25, %26 : vector<32x1xf32>
    %28 = vector.broadcast %27 : vector<32x1xf32> to vector<32x64xf32>
    %29 = arith.subf %21, %28 : vector<32x64xf32>
    %30 = arith.mulf %29, %29 : vector<32x64xf32>
    %cst_20 = arith.constant dense<0.000000e+00> : vector<32xf32>
    %31 = vector.multi_reduction <add>, %30, %cst_20 [1] : vector<32x64xf32> to vector<32xf32>
    %32 = vector.shape_cast %31 : vector<32xf32> to vector<32x1xf32>
    %cst_21 = arith.constant 6.400000e+01 : f32
    %33 = vector.broadcast %cst_21 : f32 to vector<32x1xf32>
    %34 = arith.divf %32, %33 : vector<32x1xf32>
    %35 = vector.broadcast %27 : vector<32x1xf32> to vector<32x64xf32>
    %36 = arith.subf %21, %35 : vector<32x64xf32>
    %cst_22 = arith.constant 9.99999974E-6 : f32
    %37 = vector.broadcast %cst_22 : f32 to vector<32x1xf32>
    %38 = arith.addf %34, %37 : vector<32x1xf32>
    %39 = math.rsqrt %38 : vector<32x1xf32>
    %40 = vector.broadcast %39 : vector<32x1xf32> to vector<32x64xf32>
    %41 = arith.mulf %36, %40 : vector<32x64xf32>
    %42 = vector.broadcast %22 : vector<1x64xf32> to vector<32x64xf32>
    %43 = arith.mulf %41, %42 : vector<32x64xf32>
    %44 = vector.broadcast %23 : vector<1x64xf32> to vector<32x64xf32>
    %45 = arith.addf %43, %44 : vector<32x64xf32>
    %cst_23 = arith.constant 0.000000e+00 : f32
    %46 = vector.broadcast %cst_23 : f32 to vector<32x64xf32>
    %47 = arith.maximumf %45, %46 : vector<32x64xf32>
    %48 = vector.extract_strided_slice %18 {offsets = [0, 64], sizes = [32, 64], strides = [1, 1]} : vector<32x128xf32> to vector<32x64xf32>
    %49 = vector.extract_strided_slice %19 {offsets = [0, 64], sizes = [1, 64], strides = [1, 1]} : vector<1x128xf32> to vector<1x64xf32>
    %50 = vector.extract_strided_slice %20 {offsets = [0, 64], sizes = [1, 64], strides = [1, 1]} : vector<1x128xf32> to vector<1x64xf32>
    %cst_24 = arith.constant dense<0.000000e+00> : vector<32xf32>
    %51 = vector.multi_reduction <add>, %48, %cst_24 [1] : vector<32x64xf32> to vector<32xf32>
    %52 = vector.shape_cast %51 : vector<32xf32> to vector<32x1xf32>
    %cst_25 = arith.constant 6.400000e+01 : f32
    %53 = vector.broadcast %cst_25 : f32 to vector<32x1xf32>
    %54 = arith.divf %52, %53 : vector<32x1xf32>
    %55 = vector.broadcast %54 : vector<32x1xf32> to vector<32x64xf32>
    %56 = arith.subf %48, %55 : vector<32x64xf32>
    %57 = arith.mulf %56, %56 : vector<32x64xf32>
    %cst_26 = arith.constant dense<0.000000e+00> : vector<32xf32>
    %58 = vector.multi_reduction <add>, %57, %cst_26 [1] : vector<32x64xf32> to vector<32xf32>
    %59 = vector.shape_cast %58 : vector<32xf32> to vector<32x1xf32>
    %cst_27 = arith.constant 6.400000e+01 : f32
    %60 = vector.broadcast %cst_27 : f32 to vector<32x1xf32>
    %61 = arith.divf %59, %60 : vector<32x1xf32>
    %62 = vector.broadcast %54 : vector<32x1xf32> to vector<32x64xf32>
    %63 = arith.subf %48, %62 : vector<32x64xf32>
    %cst_28 = arith.constant 9.99999974E-6 : f32
    %64 = vector.broadcast %cst_28 : f32 to vector<32x1xf32>
    %65 = arith.addf %61, %64 : vector<32x1xf32>
    %66 = math.rsqrt %65 : vector<32x1xf32>
    %67 = vector.broadcast %66 : vector<32x1xf32> to vector<32x64xf32>
    %68 = arith.mulf %63, %67 : vector<32x64xf32>
    %69 = vector.broadcast %49 : vector<1x64xf32> to vector<32x64xf32>
    %70 = arith.mulf %68, %69 : vector<32x64xf32>
    %71 = vector.broadcast %50 : vector<1x64xf32> to vector<32x64xf32>
    %72 = arith.addf %70, %71 : vector<32x64xf32>
    %cst_29 = arith.constant 0.000000e+00 : f32
    %73 = vector.broadcast %cst_29 : f32 to vector<32x64xf32>
    %74 = arith.maximumf %72, %73 : vector<32x64xf32>
    %c0_30 = arith.constant 0 : index
    %c0_31 = arith.constant 0 : index
    %75 = vector.load %arg9[%c0_30, %c0_31] : memref<1x64xf32, #tpu.memory_space<vmem>>, vector<1x64xf32>
    %76 = vector.broadcast %75 : vector<1x64xf32> to vector<32x64xf32>
    %77 = arith.mulf %47, %76 : vector<32x64xf32>
    %cst_32 = arith.constant dense<0.000000e+00> : vector<32xf32>
    %78 = vector.multi_reduction <add>, %77, %cst_32 [1] : vector<32x64xf32> to vector<32xf32>
    %79 = vector.shape_cast %78 : vector<32xf32> to vector<32x1xf32>
    %c0_33 = arith.constant 0 : index
    %c0_34 = arith.constant 0 : index
    %80 = vector.load %arg10[%c0_33, %c0_34] : memref<1x1xf32, #tpu.memory_space<vmem>>, vector<1x1xf32>
    %81 = vector.broadcast %80 : vector<1x1xf32> to vector<32x1xf32>
    %82 = arith.addf %79, %81 : vector<32x1xf32>
    %83 = arith.truncf %74 : vector<32x64xf32> to vector<32x64xbf16>
    %c0_35 = arith.constant 0 : index
    %c0_36 = arith.constant 0 : index
    %84 = vector.load %arg11[%c0_35, %c0_36] : memref<64x128xbf16, #tpu.memory_space<vmem>>, vector<64x128xbf16>
    %cst_37 = arith.constant dense<0.000000e+00> : vector<32x128xf32>
    %85 = tpu.matmul %83, %84, %cst_37 {dimension_numbers = #tpu.dot_dimension_numbers<[1], [0], [0], [1], [0, 0, 1, 1], [], []>} : vector<32x64xbf16>, vector<64x128xbf16>, vector<32x128xf32> -> vector<32x128xf32>
    %c0_38 = arith.constant 0 : index
    %c0_39 = arith.constant 0 : index
    %86 = vector.load %arg12[%c0_38, %c0_39] : memref<1x128xf32, #tpu.memory_space<vmem>>, vector<1x128xf32>
    %87 = vector.broadcast %86 : vector<1x128xf32> to vector<32x128xf32>
    %88 = arith.addf %85, %87 : vector<32x128xf32>
    %89 = vector.shape_cast %82 : vector<32x1xf32> to vector<2x16x1xf32>
    %cst_40 = arith.constant dense<0xFF800000> : vector<2x1xf32>
    %90 = vector.multi_reduction <maximumf>, %89, %cst_40 [1] : vector<2x16x1xf32> to vector<2x1xf32>
    %91 = vector.shape_cast %90 : vector<2x1xf32> to vector<2x1x1xf32>
    %92 = vector.broadcast %91 : vector<2x1x1xf32> to vector<2x16x1xf32>
    %93 = arith.subf %89, %92 : vector<2x16x1xf32>
    %94 = math.exp %93 : vector<2x16x1xf32>
    %cst_41 = arith.constant dense<0.000000e+00> : vector<2x1xf32>
    %95 = vector.multi_reduction <add>, %94, %cst_41 [1] : vector<2x16x1xf32> to vector<2x1xf32>
    %96 = vector.shape_cast %95 : vector<2x1xf32> to vector<2x1x1xf32>
    %97 = tpu.reciprocal %96 {approx = true} : vector<2x1x1xf32> -> vector<2x1x1xf32>
    %98 = vector.broadcast %97 : vector<2x1x1xf32> to vector<2x16x1xf32>
    %99 = arith.mulf %94, %98 : vector<2x16x1xf32>
    %100 = vector.shape_cast %88 : vector<32x128xf32> to vector<2x16x128xf32>
    %101 = vector.broadcast %99 : vector<2x16x1xf32> to vector<2x16x128xf32>
    %102 = arith.mulf %101, %100 : vector<2x16x128xf32>
    %cst_42 = arith.constant dense<0.000000e+00> : vector<2x128xf32>
    %103 = vector.multi_reduction <add>, %102, %cst_42 [1] : vector<2x16x128xf32> to vector<2x128xf32>
    %c0_43 = arith.constant 0 : index
    %c0_44 = arith.constant 0 : index
    %c0_45 = arith.constant 0 : index
    %104 = vector.load %arg13[%c0_43, %c0_44, %c0_45] : memref<1x2x128xf32, #tpu.memory_space<vmem>>, vector<1x2x128xf32>
    %105 = vector.shape_cast %104 : vector<1x2x128xf32> to vector<2x128xf32>
    %106 = vector.shape_cast %103 : vector<2x128xf32> to vector<1x2x128xf32>
    tpu.vector_store %arg13[%c0_43, %c0_44, %c0_45], %106 {strides = array<i32>} : memref<1x2x128xf32, #tpu.memory_space<vmem>>, vector<1x2x128xf32>,
    return
  }
  func.func @transform_0(%arg0: i32) -> (i32, i32, i32) {
    %c0_i32 = arith.constant 0 : i32
    %c0_i32_0 = arith.constant 0 : i32
    %c0_i32_1 = arith.constant 0 : i32
    return %arg0, %c0_i32, %c0_i32_0 : i32, i32, i32
  }
  func.func @transform_1(%arg0: i32) -> (i32, i32, i32) {
    %c0_i32 = arith.constant 0 : i32
    %c0_i32_0 = arith.constant 0 : i32
    %c0_i32_1 = arith.constant 0 : i32
    return %arg0, %c0_i32, %c0_i32_0 : i32, i32, i32
  }
  func.func @transform_2(%arg0: i32) -> (i32, i32) {
    %c0_i32 = arith.constant 0 : i32
    %c0_i32_0 = arith.constant 0 : i32
    %c0_i32_1 = arith.constant 0 : i32
    return %c0_i32, %c0_i32_0 : i32, i32
  }
  func.func @transform_3(%arg0: i32) -> (i32, i32) {
    %c0_i32 = arith.constant 0 : i32
    %c0_i32_0 = arith.constant 0 : i32
    %c0_i32_1 = arith.constant 0 : i32
    return %c0_i32, %c0_i32_0 : i32, i32
  }
  func.func @transform_4(%arg0: i32) -> (i32, i32) {
    %c0_i32 = arith.constant 0 : i32
    %c0_i32_0 = arith.constant 0 : i32
    %c0_i32_1 = arith.constant 0 : i32
    return %c0_i32, %c0_i32_0 : i32, i32
  }
  func.func @transform_5(%arg0: i32) -> (i32, i32) {
    %c0_i32 = arith.constant 0 : i32
    %c0_i32_0 = arith.constant 0 : i32
    %c0_i32_1 = arith.constant 0 : i32
    return %c0_i32, %c0_i32_0 : i32, i32
  }
  func.func @transform_6(%arg0: i32) -> (i32, i32) {
    %c0_i32 = arith.constant 0 : i32
    %c0_i32_0 = arith.constant 0 : i32
    %c0_i32_1 = arith.constant 0 : i32
    return %c0_i32, %c0_i32_0 : i32, i32
  }
  func.func @transform_7(%arg0: i32) -> (i32, i32) {
    %c0_i32 = arith.constant 0 : i32
    %c0_i32_0 = arith.constant 0 : i32
    %c0_i32_1 = arith.constant 0 : i32
    return %c0_i32, %c0_i32_0 : i32, i32
  }
  func.func @transform_8(%arg0: i32) -> (i32, i32) {
    %c0_i32 = arith.constant 0 : i32
    %c0_i32_0 = arith.constant 0 : i32
    %c0_i32_1 = arith.constant 0 : i32
    return %c0_i32, %c0_i32_0 : i32, i32
  }
  func.func @transform_9(%arg0: i32) -> (i32, i32) {
    %c0_i32 = arith.constant 0 : i32
    %c0_i32_0 = arith.constant 0 : i32
    %c0_i32_1 = arith.constant 0 : i32
    return %c0_i32, %c0_i32_0 : i32, i32
  }
  func.func @transform_10(%arg0: i32) -> (i32, i32) {
    %c0_i32 = arith.constant 0 : i32
    %c0_i32_0 = arith.constant 0 : i32
    %c0_i32_1 = arith.constant 0 : i32
    return %c0_i32, %c0_i32_0 : i32, i32
  }
  func.func @transform_11(%arg0: i32) -> (i32, i32) {
    %c0_i32 = arith.constant 0 : i32
    %c0_i32_0 = arith.constant 0 : i32
    %c0_i32_1 = arith.constant 0 : i32
    return %c0_i32, %c0_i32_0 : i32, i32
  }
  func.func @transform_12(%arg0: i32) -> (i32, i32, i32) {
    %c0_i32 = arith.constant 0 : i32
    %c0_i32_0 = arith.constant 0 : i32
    %c0_i32_1 = arith.constant 0 : i32
    return %arg0, %c0_i32, %c0_i32_0 : i32, i32, i32
  }
}

</mosaic_0001>

<llo_original>
// kernel: tpu_custom_call.1
$region0: #{tpu_custom_call.1}
  #allocation0 [shape = 'u32[]', space=smem, size = 0x4, offset = 0x4, fixed_abs, tag = 'smem constant byte address 0x4 - core index']
  #allocation1 [shape = 'u32[144,128]{1,0:T(1,128)}', space=vmem, size = 0x12000, scoped, tag = 'internal scratch']
  #allocation2 [shape = 'f32[1,1]{1,0:T(1,128)S(1)}', space=vmem, size = 0x200, scoped, tag = 'scoped memory for tpu_custom_call.1']
  %s0 = inlined_call_operand.hbm [shape: f32[8,16,32], index: 0, kind: input, shape index: {}]
  %s1 = inlined_call_operand.hbm [shape: f32[4,2,16], index: 1, kind: input, shape index: {}]
  %s2 = inlined_call_operand.hbm [shape: bf16[16,32], index: 2, kind: input, shape index: {}]
  %s3 = inlined_call_operand.vmem [shape: f32[1,32], index: 3, kind: input, shape index: {}]
  %s4 = inlined_call_operand.hbm [shape: bf16[32,128], index: 4, kind: input, shape index: {}]
  %s5 = inlined_call_operand.vmem [shape: f32[1,128], index: 5, kind: input, shape index: {}]
  %s6 = inlined_call_operand.vmem [shape: f32[1,128], index: 6, kind: input, shape index: {}]
  %s7 = inlined_call_operand.vmem [shape: f32[1,128], index: 7, kind: input, shape index: {}]
  %s8 = inlined_call_operand.vmem [shape: f32[1,64], index: 8, kind: input, shape index: {}]
  %s9 = inlined_call_operand.<no memory space> [shape: f32[1,1], index: 9, kind: input, shape index: {}]
  %s10 = inlined_call_operand.hbm [shape: bf16[64,128], index: 10, kind: input, shape index: {}]
  %s11 = inlined_call_operand.vmem [shape: f32[1,128], index: 11, kind: input, shape index: {}]
  %s12 = inlined_call_operand.hbm [shape: f32[4,2,128], index: 12, kind: output, shape index: {}]
  %s13 = sld [smem:[#allocation0]]
  $region101: #{tpu_custom_call.1} parent=0
    _
  %s15 = ssub.s32 1, %s13
  %s16 = scalar_select 0, %s15, %s13
  %v17 = vstv %s9
  %18 = vst [vmem:[#allocation2] sm:$0x1] %v17
  $region1: #{tpu_custom_call.1} parent=0
    #allocation3 [shape = 'u8[32768]{0}', space=vmem, size = 0x8000, scoped, tag = 'input window, operand 0']
    #allocation4 [shape = 's32[2]{0}', space=sflag, size = 0x8, scoped, tag = 'scoped memory for tpu_custom_call.1']
    #allocation5 [shape = 's32[2]{0}', space=sflag, size = 0x8, scoped, tag = 'scoped memory for tpu_custom_call.1']
    #allocation6 [shape = 'u8[2048]{0}', space=vmem, size = 0x800, scoped, tag = 'input window, operand 1']
    #allocation7 [shape = 's32[2]{0}', space=sflag, size = 0x8, scoped, tag = 'scoped memory for tpu_custom_call.1']
    #allocation8 [shape = 'u8[4096]{0}', space=vmem, size = 0x1000, scoped, tag = 'input window, operand 2, single buffered']
    #allocation9 [shape = 'u8[8192]{0}', space=vmem, size = 0x2000, scoped, tag = 'input window, operand 4, single buffered']
    #allocation10 [shape = 's32[1]{0}', space=sflag, size = 0x4, scoped, tag = 'scoped memory for tpu_custom_call.1']
    #allocation11 [shape = 'u8[16384]{0}', space=vmem, size = 0x4000, scoped, tag = 'input window, operand 10, single buffered']
    #allocation12 [shape = 'u8[2048]{0}', space=vmem, size = 0x800, scoped, tag = 'output window, operand 0']
    %19 = vsyncpa [#allocation4], 0
    %s20 = scalar_lea.sflag [#allocation4], 1
    %21 = vsyncpa %s20, 0
    %22 = vsyncpa [#allocation7], 0
    %s23 = scalar_lea.sflag [#allocation7], 1
    %24 = vsyncpa %s23, 0
    %25 = vsyncpa [#allocation10], 0
    %26 = vsyncpa [#allocation5], 0
    %s27 = scalar_lea.sflag [#allocation5], 1
    %28 = vsyncpa %s27, 0
    loop: start=0, step=1, limit=6
    $region2: #{tpu_custom_call.1} parent=1 // loop_pre_header
      _
    $region3: #{tpu_custom_call.1} parent=1 // loop_header
      %s30 = sphi 0, %s34
      %p31 = scmp.ge.s32.totalorder %s30, 6
      %s40 = sphi 0, %s42
      %s43 = sphi 0, %s40
      %s44 = sphi 0, %s43
      %s60 = sphi 0, %s44
      %s66 = sphi 0, %s68
      %s69 = sphi 0, %s66
      %s70 = sphi 0, %s69
      %s86 = sphi 0, %s70
      %s90 = sphi 0, %s90
      %s92 = sphi 0, %s90
      %s93 = sphi 0, %s92
      %s107 = sphi 0, %s93
      %s111 = sphi 0, %s111
      %s113 = sphi 0, %s111
      %s114 = sphi 0, %s113
      %s128 = sphi 0, %s114
      %s132 = sphi 0, %s132
      %s134 = sphi 0, %s132
      %s135 = sphi 0, %s134
      %s149 = sphi 0, %s135
      %s153 = sphi 0, %s153
      %s155 = sphi 0, %s153
      %s156 = sphi 0, %s155
      %s170 = sphi 0, %s156
      %s174 = sphi 0, %s174
      %s176 = sphi 0, %s174
      %s177 = sphi 0, %s176
      %s191 = sphi 0, %s177
      %s195 = sphi 0, %s195
      %s197 = sphi 0, %s195
      %s198 = sphi 0, %s197
      %s212 = sphi 0, %s198
      %s216 = sphi 0, %s216
      %s218 = sphi 0, %s216
      %s219 = sphi 0, %s218
      %s233 = sphi 0, %s219
      %s237 = sphi 0, %s237
      %s239 = sphi 0, %s237
      %s240 = sphi 0, %s239
      %s254 = sphi 0, %s240
      %s258 = sphi 0, %s258
      %s260 = sphi 0, %s258
      %s261 = sphi 0, %s260
      %s275 = sphi 0, %s261
      %s279 = sphi 0, %s279
      %s281 = sphi 0, %s279
      %s282 = sphi 0, %s281
      %s296 = sphi 0, %s282
      %s302 = sphi 0, %s304
      %s305 = sphi 0, %s302
      %s306 = sphi 0, %s305
      %s322 = sphi 0, %s306
    $region4: #{tpu_custom_call.1} parent=1 // loop_header_branch
      %33 = sbr.rel (%p31) target = $region8
    $region5: #{tpu_custom_call.1} parent=1 // loop_body
      %s35 = ssub.s32 %s30, 1
      %s36 = ssub.s32 %s30, 2
      %s37 = sadd.s32 %s30, 1
      %s38 = ssub.s32 %s30, %s37
      %p39 = scmp.eq.s32.totalorder %s38, 0
      %s41 = sadd.s32 %s40, 1
      %s42 = scalar_select %p39, %s40, %s41
      %p45 = pneg %p39
      %p46 = scmp.eq.s32.totalorder %s30, 3
      %p47 = por %p45, %p46
      %p48 = scmp.ne.s32.totalorder %s40, %s43
      %p49 = scmp.eq.s32.totalorder %s30, 0
      %p50 = por %p48, %p49
      %p51 = scmp.ne.s32.totalorder %s40, %s43
      %p52 = scmp.eq.s32.totalorder %s35, 3
      %p53 = por %p51, %p52
      %p54 = scmp.ne.s32.totalorder %s43, %s44
      %p55 = scmp.eq.s32.totalorder %s35, 0
      %p56 = por %p54, %p55
      %p57 = scmp.ne.s32.totalorder %s43, %s44
      %p58 = scmp.eq.s32.totalorder %s36, 3
      %p59 = por %p57, %p58
      %p61 = scmp.ne.s32.totalorder %s44, %s60
      %p62 = scmp.eq.s32.totalorder %s36, 0
      %p63 = por %p61, %p62
      %s64 = ssub.s32 %s30, %s37
      %p65 = scmp.eq.s32.totalorder %s64, 0
      %s67 = sadd.s32 %s66, 1
      %s68 = scalar_select %p65, %s66, %s67
      %p71 = pneg %p65
      %p72 = scmp.eq.s32.totalorder %s30, 3
      %p73 = por %p71, %p72
      %p74 = scmp.ne.s32.totalorder %s66, %s69
      %p75 = scmp.eq.s32.totalorder %s30, 0
      %p76 = por %p74, %p75
      %p77 = scmp.ne.s32.totalorder %s66, %s69
      %p78 = scmp.eq.s32.totalorder %s35, 3
      %p79 = por %p77, %p78
      %p80 = scmp.ne.s32.totalorder %s69, %s70
      %p81 = scmp.eq.s32.totalorder %s35, 0
      %p82 = por %p80, %p81
      %p83 = scmp.ne.s32.totalorder %s69, %s70
      %p84 = scmp.eq.s32.totalorder %s36, 3
      %p85 = por %p83, %p84
      %p87 = scmp.ne.s32.totalorder %s70, %s86
      %p88 = scmp.eq.s32.totalorder %s36, 0
      %p89 = por %p87, %p88
      %s91 = sadd.s32 %s90, 1
      %p94 = scmp.eq.s32.totalorder %s30, 3
      %p95 = scmp.ne.s32.totalorder %s90, %s92
      %p96 = scmp.eq.s32.totalorder %s30, 0
      %p97 = por %p95, %p96
      %p98 = scmp.ne.s32.totalorder %s90, %s92
      %p99 = scmp.eq.s32.totalorder %s35, 3
      %p100 = por %p98, %p99
      %p101 = scmp.ne.s32.totalorder %s92, %s93
      %p102 = scmp.eq.s32.totalorder %s35, 0
      %p103 = por %p101, %p102
      %p104 = scmp.ne.s32.totalorder %s92, %s93
      %p105 = scmp.eq.s32.totalorder %s36, 3
      %p106 = por %p104, %p105
      %p108 = scmp.ne.s32.totalorder %s93, %s107
      %p109 = scmp.eq.s32.totalorder %s36, 0
      %p110 = por %p108, %p109
      %s112 = sadd.s32 %s111, 1
      %p115 = scmp.eq.s32.totalorder %s30, 3
      %p116 = scmp.ne.s32.totalorder %s111, %s113
      %p117 = scmp.eq.s32.totalorder %s30, 0
      %p118 = por %p116, %p117
      %p119 = scmp.ne.s32.totalorder %s111, %s113
      %p120 = scmp.eq.s32.totalorder %s35, 3
      %p121 = por %p119, %p120
      %p122 = scmp.ne.s32.totalorder %s113, %s114
      %p123 = scmp.eq.s32.totalorder %s35, 0
      %p124 = por %p122, %p123
      %p125 = scmp.ne.s32.totalorder %s113, %s114
      %p126 = scmp.eq.s32.totalorder %s36, 3
      %p127 = por %p125, %p126
      %p129 = scmp.ne.s32.totalorder %s114, %s128
      %p130 = scmp.eq.s32.totalorder %s36, 0
      %p131 = por %p129, %p130
      %s133 = sadd.s32 %s132, 1
      %p136 = scmp.eq.s32.totalorder %s30, 3
      %p137 = scmp.ne.s32.totalorder %s132, %s134
      %p138 = scmp.eq.s32.totalorder %s30, 0
      %p139 = por %p137, %p138
      %p140 = scmp.ne.s32.totalorder %s132, %s134
      %p141 = scmp.eq.s32.totalorder %s35, 3
      %p142 = por %p140, %p141
      %p143 = scmp.ne.s32.totalorder %s134, %s135
      %p144 = scmp.eq.s32.totalorder %s35, 0
      %p145 = por %p143, %p144
      %p146 = scmp.ne.s32.totalorder %s134, %s135
      %p147 = scmp.eq.s32.totalorder %s36, 3
      %p148 = por %p146, %p147
      %p150 = scmp.ne.s32.totalorder %s135, %s149
      %p151 = scmp.eq.s32.totalorder %s36, 0
      %p152 = por %p150, %p151
      %s154 = sadd.s32 %s153, 1
      %p157 = scmp.eq.s32.totalorder %s30, 3
      %p158 = scmp.ne.s32.totalorder %s153, %s155
      %p159 = scmp.eq.s32.totalorder %s30, 0
      %p160 = por %p158, %p159
      %p161 = scmp.ne.s32.totalorder %s153, %s155
      %p162 = scmp.eq.s32.totalorder %s35, 3
      %p163 = por %p161, %p162
      %p164 = scmp.ne.s32.totalorder %s155, %s156
      %p165 = scmp.eq.s32.totalorder %s35, 0
      %p166 = por %p164, %p165
      %p167 = scmp.ne.s32.totalorder %s155, %s156
      %p168 = scmp.eq.s32.totalorder %s36, 3
      %p169 = por %p167, %p168
      %p171 = scmp.ne.s32.totalorder %s156, %s170
      %p172 = scmp.eq.s32.totalorder %s36, 0
      %p173 = por %p171, %p172
      %s175 = sadd.s32 %s174, 1
      %p178 = scmp.eq.s32.totalorder %s30, 3
      %p179 = scmp.ne.s32.totalorder %s174, %s176
      %p180 = scmp.eq.s32.totalorder %s30, 0
      %p181 = por %p179, %p180
      %p182 = scmp.ne.s32.totalorder %s174, %s176
      %p183 = scmp.eq.s32.totalorder %s35, 3
      %p184 = por %p182, %p183
      %p185 = scmp.ne.s32.totalorder %s176, %s177
      %p186 = scmp.eq.s32.totalorder %s35, 0
      %p187 = por %p185, %p186
      %p188 = scmp.ne.s32.totalorder %s176, %s177
      %p189 = scmp.eq.s32.totalorder %s36, 3
      %p190 = por %p188, %p189
      %p192 = scmp.ne.s32.totalorder %s177, %s191
      %p193 = scmp.eq.s32.totalorder %s36, 0
      %p194 = por %p192, %p193
      %s196 = sadd.s32 %s195, 1
      %p199 = scmp.eq.s32.totalorder %s30, 3
      %p200 = scmp.ne.s32.totalorder %s195, %s197
      %p201 = scmp.eq.s32.totalorder %s30, 0
      %p202 = por %p200, %p201
      %p203 = scmp.ne.s32.totalorder %s195, %s197
      %p204 = scmp.eq.s32.totalorder %s35, 3
      %p205 = por %p203, %p204
      %p206 = scmp.ne.s32.totalorder %s197, %s198
      %p207 = scmp.eq.s32.totalorder %s35, 0
      %p208 = por %p206, %p207
      %p209 = scmp.ne.s32.totalorder %s197, %s198
      %p210 = scmp.eq.s32.totalorder %s36, 3
      %p211 = por %p209, %p210
      %p213 = scmp.ne.s32.totalorder %s198, %s212
      %p214 = scmp.eq.s32.totalorder %s36, 0
      %p215 = por %p213, %p214
      %s217 = sadd.s32 %s216, 1
      %p220 = scmp.eq.s32.totalorder %s30, 3
      %p221 = scmp.ne.s32.totalorder %s216, %s218
      %p222 = scmp.eq.s32.totalorder %s30, 0
      %p223 = por %p221, %p222
      %p224 = scmp.ne.s32.totalorder %s216, %s218
      %p225 = scmp.eq.s32.totalorder %s35, 3
      %p226 = por %p224, %p225
      %p227 = scmp.ne.s32.totalorder %s218, %s219
      %p228 = scmp.eq.s32.totalorder %s35, 0
      %p229 = por %p227, %p228
      %p230 = scmp.ne.s32.totalorder %s218, %s219
      %p231 = scmp.eq.s32.totalorder %s36, 3
      %p232 = por %p230, %p231
      %p234 = scmp.ne.s32.totalorder %s219, %s233
      %p235 = scmp.eq.s32.totalorder %s36, 0
      %p236 = por %p234, %p235
      %s238 = sadd.s32 %s237, 1
      %p241 = scmp.eq.s32.totalorder %s30, 3
      %p242 = scmp.ne.s32.totalorder %s237, %s239
      %p243 = scmp.eq.s32.totalorder %s30, 0
      %p244 = por %p242, %p243
      %p245 = scmp.ne.s32.totalorder %s237, %s239
      %p246 = scmp.eq.s32.totalorder %s35, 3
      %p247 = por %p245, %p246
      %p248 = scmp.ne.s32.totalorder %s239, %s240
      %p249 = scmp.eq.s32.totalorder %s35, 0
      %p250 = por %p248, %p249
      %p251 = scmp.ne.s32.totalorder %s239, %s240
      %p252 = scmp.eq.s32.totalorder %s36, 3
      %p253 = por %p251, %p252
      %p255 = scmp.ne.s32.totalorder %s240, %s254
      %p256 = scmp.eq.s32.totalorder %s36, 0
      %p257 = por %p255, %p256
      %s259 = sadd.s32 %s258, 1
      %p262 = scmp.eq.s32.totalorder %s30, 3
      %p263 = scmp.ne.s32.totalorder %s258, %s260
      %p264 = scmp.eq.s32.totalorder %s30, 0
      %p265 = por %p263, %p264
      %p266 = scmp.ne.s32.totalorder %s258, %s260
      %p267 = scmp.eq.s32.totalorder %s35, 3
      %p268 = por %p266, %p267
      %p269 = scmp.ne.s32.totalorder %s260, %s261
      %p270 = scmp.eq.s32.totalorder %s35, 0
      %p271 = por %p269, %p270
      %p272 = scmp.ne.s32.totalorder %s260, %s261
      %p273 = scmp.eq.s32.totalorder %s36, 3
      %p274 = por %p272, %p273
      %p276 = scmp.ne.s32.totalorder %s261, %s275
      %p277 = scmp.eq.s32.totalorder %s36, 0
      %p278 = por %p276, %p277
      %s280 = sadd.s32 %s279, 1
      %p283 = scmp.eq.s32.totalorder %s30, 3
      %p284 = scmp.ne.s32.totalorder %s279, %s281
      %p285 = scmp.eq.s32.totalorder %s30, 0
      %p286 = por %p284, %p285
      %p287 = scmp.ne.s32.totalorder %s279, %s281
      %p288 = scmp.eq.s32.totalorder %s35, 3
      %p289 = por %p287, %p288
      %p290 = scmp.ne.s32.totalorder %s281, %s282
      %p291 = scmp.eq.s32.totalorder %s35, 0
      %p292 = por %p290, %p291
      %p293 = scmp.ne.s32.totalorder %s281, %s282
      %p294 = scmp.eq.s32.totalorder %s36, 3
      %p295 = por %p293, %p294
      %p297 = scmp.ne.s32.totalorder %s282, %s296
      %p298 = scmp.eq.s32.totalorder %s36, 0
      %p299 = por %p297, %p298
      %s300 = ssub.s32 %s30, %s37
      %p301 = scmp.eq.s32.totalorder %s300, 0
      %s303 = sadd.s32 %s302, 1
      %s304 = scalar_select %p301, %s302, %s303
      %p307 = pneg %p301
      %p308 = scmp.eq.s32.totalorder %s30, 3
      %p309 = por %p307, %p308
      %p310 = scmp.ne.s32.totalorder %s302, %s305
      %p311 = scmp.eq.s32.totalorder %s30, 0
      %p312 = por %p310, %p311
      %p313 = scmp.ne.s32.totalorder %s302, %s305
      %p314 = scmp.eq.s32.totalorder %s35, 3
      %p315 = por %p313, %p314
      %p316 = scmp.ne.s32.totalorder %s305, %s306
      %p317 = scmp.eq.s32.totalorder %s35, 0
      %p318 = por %p316, %p317
      %p319 = scmp.ne.s32.totalorder %s305, %s306
      %p320 = scmp.eq.s32.totalorder %s36, 3
      %p321 = por %p319, %p320
      %p323 = scmp.ne.s32.totalorder %s306, %s322
      %p324 = scmp.eq.s32.totalorder %s36, 0
      %p325 = por %p323, %p324
      %p326 = scmp.le.s32.totalorder 1, %s30
      %p327 = scmp.lt.s32.totalorder %s30, 5
      %p328 = pnand %p326, %p327
      %p329 = pneg %p328
      // Predicated region
      $region9: #{tpu_custom_call.1} parent=5 // pred_check
        _
      $region10: #{tpu_custom_call.1} parent=5 // pred_check_branch
        %331 = sbr.rel (%p328) target = $region12
      $region11: #{tpu_custom_call.1} parent=5 // pred_region
        %s332 = ssub.s32 %s30, 1
        // Predicated region
        $region13: #{tpu_custom_call.1} parent=11 // pred_check
          %p333 = pneg %p103
        $region14: #{tpu_custom_call.1} parent=11 // pred_check_branch
          %335 = sbr.rel (%p333) target = $region16
        $region15: #{tpu_custom_call.1} parent=11 // pred_region
          %s337 = ssub.s32 128, 128
          %338 = vsyncadd [#allocation7], %s337
          %s339 = sshll.u32 [#allocation8], 4
          %s340 = int_to_ptr.vmem [resolvable:$true] %s339
          %345 = dma.hbm_to_vmem [thread:$0]  %s2, 128, %s340, [#allocation7], 64, 64, 4
        $region16: #{tpu_custom_call.1} parent=11 // pred_fallthru
          _
        // Predicated region
        $region17: #{tpu_custom_call.1} parent=11 // pred_check
          %p346 = pneg %p124
        $region18: #{tpu_custom_call.1} parent=11 // pred_check_branch
          %348 = sbr.rel (%p346) target = $region20
        $region19: #{tpu_custom_call.1} parent=11 // pred_region
          _
        $region20: #{tpu_custom_call.1} parent=11 // pred_fallthru
          _
        // Predicated region
        $region21: #{tpu_custom_call.1} parent=11 // pred_check
          %p349 = pneg %p145
        $region22: #{tpu_custom_call.1} parent=11 // pred_check_branch
          %351 = sbr.rel (%p349) target = $region24
        $region23: #{tpu_custom_call.1} parent=11 // pred_region
          %s353 = ssub.s32 256, 256
          %354 = vsyncadd [#allocation10], %s353
          %s355 = sshll.u32 [#allocation9], 4
          %s356 = int_to_ptr.vmem [resolvable:$true] %s355
          %361 = dma.hbm_to_vmem [thread:$0]  %s4, 256, %s356, [#allocation10], 64, 64, 4
        $region24: #{tpu_custom_call.1} parent=11 // pred_fallthru
          _
        // Predicated region
        $region25: #{tpu_custom_call.1} parent=11 // pred_check
          %p362 = pneg %p166
        $region26: #{tpu_custom_call.1} parent=11 // pred_check_branch
          %364 = sbr.rel (%p362) target = $region28
        $region27: #{tpu_custom_call.1} parent=11 // pred_region
          _
        $region28: #{tpu_custom_call.1} parent=11 // pred_fallthru
          _
        // Predicated region
        $region29: #{tpu_custom_call.1} parent=11 // pred_check
          %p365 = pneg %p187
        $region30: #{tpu_custom_call.1} parent=11 // pred_check_branch
          %367 = sbr.rel (%p365) target = $region32
        $region31: #{tpu_custom_call.1} parent=11 // pred_region
          _
        $region32: #{tpu_custom_call.1} parent=11 // pred_fallthru
          _
        // Predicated region
        $region33: #{tpu_custom_call.1} parent=11 // pred_check
          %p368 = pneg %p208
        $region34: #{tpu_custom_call.1} parent=11 // pred_check_branch
          %370 = sbr.rel (%p368) target = $region36
        $region35: #{tpu_custom_call.1} parent=11 // pred_region
          _
        $region36: #{tpu_custom_call.1} parent=11 // pred_fallthru
          _
        // Predicated region
        $region37: #{tpu_custom_call.1} parent=11 // pred_check
          %p371 = pneg %p229
        $region38: #{tpu_custom_call.1} parent=11 // pred_check_branch
          %373 = sbr.rel (%p371) target = $region40
        $region39: #{tpu_custom_call.1} parent=11 // pred_region
          _
        $region40: #{tpu_custom_call.1} parent=11 // pred_fallthru
          _
        // Predicated region
        $region41: #{tpu_custom_call.1} parent=11 // pred_check
          %p374 = pneg %p250
        $region42: #{tpu_custom_call.1} parent=11 // pred_check_branch
          %376 = sbr.rel (%p374) target = $region44
        $region43: #{tpu_custom_call.1} parent=11 // pred_region
          _
        $region44: #{tpu_custom_call.1} parent=11 // pred_fallthru
          _
        // Predicated region
        $region45: #{tpu_custom_call.1} parent=11 // pred_check
          %p377 = pneg %p271
        $region46: #{tpu_custom_call.1} parent=11 // pred_check_branch
          %379 = sbr.rel (%p377) target = $region48
        $region47: #{tpu_custom_call.1} parent=11 // pred_region
          %s381 = ssub.s32 512, 512
          %382 = vsyncadd [#allocation10], %s381
          %s383 = sshll.u32 [#allocation11], 4
          %s384 = int_to_ptr.vmem [resolvable:$true] %s383
          %389 = dma.hbm_to_vmem [thread:$0]  %s10, 512, %s384, [#allocation10], 64, 64, 4
        $region48: #{tpu_custom_call.1} parent=11 // pred_fallthru
          _
        // Predicated region
        $region49: #{tpu_custom_call.1} parent=11 // pred_check
          %p390 = pneg %p292
        $region50: #{tpu_custom_call.1} parent=11 // pred_check_branch
          %392 = sbr.rel (%p390) target = $region52
        $region51: #{tpu_custom_call.1} parent=11 // pred_region
          _
        $region52: #{tpu_custom_call.1} parent=11 // pred_fallthru
          _
      $region12: #{tpu_custom_call.1} parent=5 // pred_fallthru
        _
      %p393 = scmp.lt.s32.totalorder %s30, 4
      // Predicated region
      $region53: #{tpu_custom_call.1} parent=5 // pred_check
        %p394 = pneg %p393
      $region54: #{tpu_custom_call.1} parent=5 // pred_check_branch
        %396 = sbr.rel (%p394) target = $region56
      $region55: #{tpu_custom_call.1} parent=5 // pred_region
        // Predicated region
        $region57: #{tpu_custom_call.1} parent=55 // pred_check
          %p397 = pneg %p50
        $region58: #{tpu_custom_call.1} parent=55 // pred_check_branch
          %399 = sbr.rel (%p397) target = $region60
        $region59: #{tpu_custom_call.1} parent=55 // pred_region
          %s400 = sand.u32 %s40, 1
          %s401 = scalar_lea.sflag [#allocation4], %s400
          %s402 = sand.u32 %s40, 1
          %s403 = smul.addr %s402, 32
          %s404 = scalar_lea.vmem [#allocation3], %s403
          %s405 = smul.u32 2, %s30
          %s407 = ssub.s32 512, 512
          %408 = vsyncadd %s401, %s407
          %s409 = smul.addr %s405, 2
          %s410 = smul.addr %s409, 128
          %s411 = scalar_lea.hbm %s0, %s410
          %s412 = sshll.u32 %s404, 4
          %s413 = int_to_ptr.vmem [resolvable:$true] %s412
          %418 = dma.hbm_to_vmem [thread:$0]  %s411, 512, %s413, %s401, 128, 128, 8
        $region60: #{tpu_custom_call.1} parent=55 // pred_fallthru
          _
        // Predicated region
        $region61: #{tpu_custom_call.1} parent=55 // pred_check
          %p419 = pneg %p76
        $region62: #{tpu_custom_call.1} parent=55 // pred_check_branch
          %421 = sbr.rel (%p419) target = $region64
        $region63: #{tpu_custom_call.1} parent=55 // pred_region
          %s422 = sand.u32 %s30, 1
          %s423 = scalar_lea.sflag [#allocation7], %s422
          %s424 = sand.u32 %s66, 1
          %s425 = smul.addr %s424, 2
          %s426 = scalar_lea.vmem [#allocation6], %s425
          %s428 = ssub.s32 32, 32
          %429 = vsyncadd %s423, %s428
          %s430 = smul.addr %s30, 32
          %s431 = scalar_lea.hbm %s1, %s430
          %s433 = sshll.u32 %s426, 4
          %s434 = int_to_ptr.vmem [resolvable:$true] %s433
          %436 = dma.hbm_to_vmem [thread:$0]  %s431, 32, %s434, %s423
        $region64: #{tpu_custom_call.1} parent=55 // pred_fallthru
          _
      $region56: #{tpu_custom_call.1} parent=5 // pred_fallthru
        _
      %p437 = scmp.le.s32.totalorder 1, %s30
      %p438 = scmp.lt.s32.totalorder %s30, 5
      %p439 = pnand %p437, %p438
      %p440 = pneg %p439
      // Predicated region
      $region65: #{tpu_custom_call.1} parent=5 // pred_check
        _
      $region66: #{tpu_custom_call.1} parent=5 // pred_check_branch
        %442 = sbr.rel (%p439) target = $region68
      $region67: #{tpu_custom_call.1} parent=5 // pred_region
        %s443 = ssub.s32 %s30, 1
        %s444 = sand.u32 %s43, 1
        %s445 = scalar_lea.sflag [#allocation4], %s444
        %s446 = sand.u32 %s43, 1
        %s447 = smul.addr %s446, 32
        %s448 = scalar_lea.vmem [#allocation3], %s447
        // Predicated region
        $region69: #{tpu_custom_call.1} parent=67 // pred_check
          %p449 = pneg %p56
        $region70: #{tpu_custom_call.1} parent=67 // pred_check_branch
          %451 = sbr.rel (%p449) target = $region72
        $region71: #{tpu_custom_call.1} parent=67 // pred_region
          %452 = dma.done %s445, 512
        $region72: #{tpu_custom_call.1} parent=67 // pred_fallthru
          _
        %s453 = sand.u32 %s35, 1
        %s454 = scalar_lea.sflag [#allocation7], %s453
        %s455 = sand.u32 %s69, 1
        %s456 = smul.addr %s455, 2
        %s457 = scalar_lea.vmem [#allocation6], %s456
        // Predicated region
        $region73: #{tpu_custom_call.1} parent=67 // pred_check
          %p458 = pneg %p82
        $region74: #{tpu_custom_call.1} parent=67 // pred_check_branch
          %460 = sbr.rel (%p458) target = $region76
        $region75: #{tpu_custom_call.1} parent=67 // pred_region
          %461 = dma.done %s454, 32
        $region76: #{tpu_custom_call.1} parent=67 // pred_fallthru
          _
        // Predicated region
        $region77: #{tpu_custom_call.1} parent=67 // pred_check
          %p462 = pneg %p103
        $region78: #{tpu_custom_call.1} parent=67 // pred_check_branch
          %464 = sbr.rel (%p462) target = $region80
        $region79: #{tpu_custom_call.1} parent=67 // pred_region
          %465 = dma.done [#allocation7], 128
        $region80: #{tpu_custom_call.1} parent=67 // pred_fallthru
          _
        // Predicated region
        $region81: #{tpu_custom_call.1} parent=67 // pred_check
          %p466 = pneg %p145
        $region82: #{tpu_custom_call.1} parent=67 // pred_check_branch
          %468 = sbr.rel (%p466) target = $region84
        $region83: #{tpu_custom_call.1} parent=67 // pred_region
          %469 = dma.done [#allocation10], 256
        $region84: #{tpu_custom_call.1} parent=67 // pred_fallthru
          _
        // Predicated region
        $region85: #{tpu_custom_call.1} parent=67 // pred_check
          %p470 = pneg %p271
        $region86: #{tpu_custom_call.1} parent=67 // pred_check_branch
          %472 = sbr.rel (%p470) target = $region88
        $region87: #{tpu_custom_call.1} parent=67 // pred_region
          %473 = dma.done [#allocation10], 512
        $region88: #{tpu_custom_call.1} parent=67 // pred_fallthru
          _
        %s474 = sand.u32 %s43, 1
        %s475 = scalar_lea.sflag [#allocation4], %s474
        %s476 = sand.u32 %s43, 1
        %s477 = smul.addr %s476, 32
        %s478 = scalar_lea.vmem [#allocation3], %s477
        %p479 = pneg %p56
        %p480 = pneg %p53
        %s481 = sand.u32 %s35, 1
        %s482 = scalar_lea.sflag [#allocation7], %s481
        %s483 = sand.u32 %s69, 1
        %s484 = smul.addr %s483, 2
        %s485 = scalar_lea.vmem [#allocation6], %s484
        %p486 = pneg %p82
        %p487 = pneg %p79
        %p488 = pneg %p103
        %p489 = pneg %p100
        %p490 = pneg %p124
        %p491 = pneg %p121
        %p492 = pneg %p145
        %p493 = pneg %p142
        %p494 = pneg %p166
        %p495 = pneg %p163
        %p496 = pneg %p187
        %p497 = pneg %p184
        %p498 = pneg %p208
        %p499 = pneg %p205
        %p500 = pneg %p229
        %p501 = pneg %p226
        %p502 = pneg %p250
        %p503 = pneg %p247
        %p504 = pneg %p271
        %p505 = pneg %p268
        %p506 = pneg %p292
        %p507 = pneg %p289
        %p508 = pneg %p318
        %p509 = pneg %p315
        %s510 = sand.u32 %s305, 1
        %s511 = scalar_lea.sflag [#allocation5], %s510
        %s512 = sand.u32 %s305, 1
        %s513 = smul.addr %s512, 2
        %s514 = scalar_lea.vmem [#allocation12], %s513
        %s515 = smul.u32 2, %s35
        %v517 = vld [vmem:[%s457] sm:$0x3]
        %v518 = vpack.c.bf16 %v517, %v517
        %v519 = vld [vmem:[#allocation8] sm:$0xf]
        %v520 = vld [vmem:[#allocation8 + $0x4] sm:$0xf]
        %v521 = vld [vmem:[%s3] sm:$0x1]
        %v523 = vlaneseq
        %v524 = vshrl.u32 %v523, 7
        %v525 = vsub.s32 0, %v524
        %v526 = vrot.slane %v521, %v525
        %v530 = vunpack.c.l.b16 %v519
        %v531 = vunpack.c.l.b16 %v520
        %v532 = vpack.c.b16 %v531, %v530
        %vm534 = vcmask 130048
        %v536 = vsel %vm534, %v518, 0
        %538 = vmatprep.subr.bf16.mxu0 0
        %539 = vmatpush1.bf16.msra.mxu0 0
        %540 = vmatprep.subr.bf16.mxu0 0
        %541 = vmatpush1.bf16.msra.mxu0 0
        %542 = vmatprep.subr.bf16.mxu0 0
        %543 = vmatpush1.bf16.msra.mxu0 0
        %544 = vmatprep.subr.bf16.mxu0 0
        %545 = vmatpush1.bf16.msra.mxu0 0
        %546 = vmatprep.subr.bf16.mxu0 0
        %547 = vmatpush1.bf16.msra.mxu0 0
        %548 = vmatprep.subr.bf16.mxu0 0
        %549 = vmatpush1.bf16.msra.mxu0 0
        %550 = vmatprep.subr.bf16.mxu0 0
        %551 = vmatpush1.bf16.msra.mxu0 0
        %552 = vmatprep.subr.bf16.mxu0 0
        %553 = vmatpush1.bf16.msra.mxu0 %v532
        %554 = vmatprep.subr.bf16.mxu0 0
        %555 = vmatpush2.bf16.msra.mxu0 0
        %556 = vmatprep.subr.bf16.mxu0 0
        %557 = vmatpush2.bf16.msra.mxu0 0
        %558 = vmatprep.subr.bf16.mxu0 0
        %559 = vmatpush2.bf16.msra.mxu0 0
        %560 = vmatprep.subr.bf16.mxu0 0
        %561 = vmatpush2.bf16.msra.mxu0 0
        %562 = vmatprep.subr.bf16.mxu0 0
        %563 = vmatpush2.bf16.msra.mxu0 0
        %564 = vmatprep.subr.bf16.mxu0 0
        %565 = vmatpush2.bf16.msra.mxu0 0
        %566 = vmatprep.subr.bf16.mxu0 0
        %567 = vmatpush2.bf16.msra.mxu0 0
        %568 = vmatprep.subr.bf16.mxu0 0
        %569 = vmatpush2.bf16.msra.mxu0 0
        %570 = vmatprep.mubr.bf16.mxu0 0
        %571 = vmatmul.mubr.bf16.gmra.mxu0 %v536
        %v572 = vpop.f32.mrf.mxu0
        %v573 = vadd.f32 %v526, %v572
        %v574 = vpop.f32.mrf.mxu0
        %v575 = vpop.f32.mrf.mxu0
        %v576 = vpop.f32.mrf.mxu0
        %577 = vdwg.mxu0
        %v578 = vld [vmem:[%s448] sm:$0xff]
        %v579 = vld [vmem:[%s448 + $0x8] sm:$0xff]
        %v580 = vld [vmem:[%s448 + $0x10] sm:$0xff]
        %v581 = vld [vmem:[%s448 + $0x18] sm:$0xff]
        %v584 = vunpack.c.l.s4 1966171168
        %v585 = vunpack.c.0.s8 %v584
        %v586 = vlaneseq
        %v587 = vshrl.u32 %v586, 7
        %v588 = vsub.s32 %v585, %v587
        %v589 = vrot.slane %v573, %v588
        %v590 = vcombine.high %v589, %v589
        %v592 = vunpack.c.l.s4 1966171168
        %v593 = vunpack.c.0.s8 %v592
        %v594 = vlaneseq
        %v595 = vshrl.u32 %v594, 7
        %v596 = vsub.s32 %v593, %v595
        %v597 = vrot.slane %v589, %v596
        %v599 = vunpack.c.l.s4 1966171168
        %v600 = vunpack.c.0.s8 %v599
        %v601 = vlaneseq
        %v602 = vshrl.u32 %v601, 7
        %v603 = vsub.s32 %v600, %v602
        %v604 = vrot.slane %v590, %v603
        %v605 = vlaneseq
        %v606 = vshrl.u32 %v605, 7
        %v607 = vsub.s32 0, %v606
        %v608 = vrot.slane %v597, %v607
        %v609 = vlaneseq
        %v610 = vshrl.u32 %v609, 7
        %v611 = vsub.s32 0, %v610
        %v612 = vrot.slane %v604, %v611
        %v615 = vadd.f32 %v578, %v608
        %v616 = vadd.f32 %v579, %v608
        %v617 = vadd.f32 %v580, %v612
        %v618 = vadd.f32 %v581, %v612
        %v619 = vpack.c.bf16 %v616, %v615
        %v620 = vpack.c.bf16 %v618, %v617
        %v621 = vld [vmem:[#allocation9] sm:$0xf]
        %v622 = vld [vmem:[#allocation9 + $0x4] sm:$0xf]
        %v623 = vld [vmem:[#allocation9 + $0x8] sm:$0xf]
        %v624 = vld [vmem:[#allocation9 + $0xc] sm:$0xf]
        %v625 = vld [vmem:[%s5] sm:$0x1]
        %v627 = vlaneseq
        %v628 = vshrl.u32 %v627, 7
        %v629 = vsub.s32 0, %v628
        %v630 = vrot.slane %v625, %v629
        %v636 = vunpack.c.l.b16 %v621
        %v637 = vunpack.c.l.b16 %v622
        %v638 = vunpack.c.l.b16 %v623
        %v639 = vunpack.c.l.b16 %v624
        %v640 = vpack.c.b16 %v637, %v636
        %v641 = vpack.c.b16 %v639, %v638
        %vm644 = vcmask 261120
        %v646 = vsel %vm644, %v619, 0
        %v649 = vsel %vm644, %v620, 0
        %651 = vmatprep.subr.bf16.mxu0 0
        %652 = vmatpush1.bf16.msra.mxu0 0
        %653 = vmatprep.subr.bf16.mxu0 0
        %654 = vmatpush1.bf16.msra.mxu0 0
        %655 = vmatprep.subr.bf16.mxu0 0
        %656 = vmatpush1.bf16.msra.mxu0 0
        %657 = vmatprep.subr.bf16.mxu0 0
        %658 = vmatpush1.bf16.msra.mxu0 0
        %659 = vmatprep.subr.bf16.mxu0 0
        %660 = vmatpush1.bf16.msra.mxu0 0
        %661 = vmatprep.subr.bf16.mxu0 0
        %662 = vmatpush1.bf16.msra.mxu0 0
        %663 = vmatprep.subr.bf16.mxu0 0
        %664 = vmatpush1.bf16.msra.mxu0 %v641
        %665 = vmatprep.subr.bf16.mxu0 0
        %666 = vmatpush1.bf16.msra.mxu0 %v640
        %667 = vmatprep.subr.bf16.mxu0 0
        %668 = vmatpush2.bf16.msra.mxu0 0
        %669 = vmatprep.subr.bf16.mxu0 0
        %670 = vmatpush2.bf16.msra.mxu0 0
        %671 = vmatprep.subr.bf16.mxu0 0
        %672 = vmatpush2.bf16.msra.mxu0 0
        %673 = vmatprep.subr.bf16.mxu0 0
        %674 = vmatpush2.bf16.msra.mxu0 0
        %675 = vmatprep.subr.bf16.mxu0 0
        %676 = vmatpush2.bf16.msra.mxu0 0
        %677 = vmatprep.subr.bf16.mxu0 0
        %678 = vmatpush2.bf16.msra.mxu0 0
        %679 = vmatprep.subr.bf16.mxu0 0
        %680 = vmatpush2.bf16.msra.mxu0 0
        %681 = vmatprep.subr.bf16.mxu0 0
        %682 = vmatpush2.bf16.msra.mxu0 0
        %683 = vmatprep.mubr.bf16.mxu0 0
        %684 = vmatmul.mubr.bf16.gmra.mxu0 %v646
        %v685 = vpop.f32.mrf.mxu0
        %v686 = vadd.f32 %v630, %v685
        %v687 = vpop.f32.mrf.mxu0
        %v688 = vpop.f32.mrf.mxu0
        %v689 = vadd.f32 %v630, %v688
        %v690 = vpop.f32.mrf.mxu0
        %691 = vmatprep.mubr.bf16.mxu0 0
        %692 = vmatmul.mubr.bf16.gmra.mxu0 %v649
        %v693 = vpop.f32.mrf.mxu0
        %v694 = vadd.f32 %v630, %v693
        %v695 = vpop.f32.mrf.mxu0
        %v696 = vpop.f32.mrf.mxu0
        %v697 = vadd.f32 %v630, %v696
        %v698 = vpop.f32.mrf.mxu0
        %699 = vdwg.mxu0
        %v700 = vld [vmem:[%s6] sm:$0x1]
        %v701 = vld [vmem:[%s7] sm:$0x1]
        %vm702 = vcmask 523264
        %v703 = vsel %vm702, %v686, 0.0
        %704 = vadd.xlane.f32.xlu0 %v703
        %v705 = vpop.xlane.xlu0 %704
        %v706 = vsel %vm702, %v689, 0.0
        %707 = vadd.xlane.f32.xlu0 %v706
        %v708 = vpop.xlane.xlu0 %707
        %v709 = vsel %vm702, %v694, 0.0
        %710 = vadd.xlane.f32.xlu0 %v709
        %v711 = vpop.xlane.xlu0 %710
        %v712 = vsel %vm702, %v697, 0.0
        %713 = vadd.xlane.f32.xlu0 %v712
        %v714 = vpop.xlane.xlu0 %713
        %v715 = vrcp.pop 64.0
        %v716 = vmul.f32 %v705, %v715
        %v717 = vmul.f32 %v708, %v715
        %v718 = vmul.f32 %v711, %v715
        %v719 = vmul.f32 %v714, %v715
        %v720 = vsub.f32 %v686, %v716
        %v721 = vsub.f32 %v689, %v717
        %v722 = vsub.f32 %v694, %v718
        %v723 = vsub.f32 %v697, %v719
        %v724 = vmul.f32 %v720, %v720
        %v725 = vmul.f32 %v721, %v721
        %v726 = vmul.f32 %v722, %v722
        %v727 = vmul.f32 %v723, %v723
        %v728 = vsel %vm702, %v724, 0.0
        %729 = vadd.xlane.f32.xlu0 %v728
        %v730 = vpop.xlane.xlu0 %729
        %v731 = vsel %vm702, %v725, 0.0
        %732 = vadd.xlane.f32.xlu0 %v731
        %v733 = vpop.xlane.xlu0 %732
        %v734 = vsel %vm702, %v726, 0.0
        %735 = vadd.xlane.f32.xlu0 %v734
        %v736 = vpop.xlane.xlu0 %735
        %v737 = vsel %vm702, %v727, 0.0
        %738 = vadd.xlane.f32.xlu0 %v737
        %v739 = vpop.xlane.xlu0 %738
        %v740 = vmul.f32 %v730, %v715
        %v741 = vmul.f32 %v733, %v715
        %v742 = vmul.f32 %v736, %v715
        %v743 = vmul.f32 %v739, %v715
        %v744 = vadd.f32 %v740, 1e-05
        %v745 = vadd.f32 %v741, 1e-05
        %v746 = vadd.f32 %v742, 1e-05
        %v747 = vadd.f32 %v743, 1e-05
        %v748 = vrsqrt.pop %v744
        %v749 = vrsqrt.pop %v745
        %v750 = vrsqrt.pop %v746
        %v751 = vrsqrt.pop %v747
        %v752 = vmul.f32 %v720, %v748
        %v753 = vmul.f32 %v721, %v749
        %v754 = vmul.f32 %v722, %v750
        %v755 = vmul.f32 %v723, %v751
        %v757 = vlaneseq
        %v758 = vshrl.u32 %v757, 7
        %v759 = vsub.s32 0, %v758
        %v760 = vrot.slane %v700, %v759
        %v762 = vmul.f32 %v752, %v760
        %v763 = vmul.f32 %v753, %v760
        %v764 = vmul.f32 %v754, %v760
        %v765 = vmul.f32 %v755, %v760
        %v767 = vlaneseq
        %v768 = vshrl.u32 %v767, 7
        %v769 = vsub.s32 0, %v768
        %v770 = vrot.slane %v701, %v769
        %v772 = vadd.f32 %v762, %v770
        %v773 = vadd.f32 %v763, %v770
        %v774 = vadd.f32 %v764, %v770
        %v775 = vadd.f32 %v765, %v770
        %v776 = vmax.f32 %v772, 0.0
        %v777 = vmax.f32 %v773, 0.0
        %v778 = vmax.f32 %v774, 0.0
        %v779 = vmax.f32 %v775, 0.0
        %784 = vrot.lane.b32.xlu0 %v686, 64
        %v785 = vpop.permute.xlu0 %784
        %786 = vrot.lane.b32.xlu0 %v689, 64
        %v787 = vpop.permute.xlu0 %786
        %788 = vrot.lane.b32.xlu0 %v694, 64
        %v789 = vpop.permute.xlu0 %788
        %790 = vrot.lane.b32.xlu0 %v697, 64
        %v791 = vpop.permute.xlu0 %790
        %v796 = vsel %vm702, %v785, 0.0
        %797 = vadd.xlane.f32.xlu0 %v796
        %v798 = vpop.xlane.xlu0 %797
        %v799 = vsel %vm702, %v787, 0.0
        %800 = vadd.xlane.f32.xlu0 %v799
        %v801 = vpop.xlane.xlu0 %800
        %v802 = vsel %vm702, %v789, 0.0
        %803 = vadd.xlane.f32.xlu0 %v802
        %v804 = vpop.xlane.xlu0 %803
        %v805 = vsel %vm702, %v791, 0.0
        %806 = vadd.xlane.f32.xlu0 %v805
        %v807 = vpop.xlane.xlu0 %806
        %v808 = vmul.f32 %v798, %v715
        %v809 = vmul.f32 %v801, %v715
        %v810 = vmul.f32 %v804, %v715
        %v811 = vmul.f32 %v807, %v715
        %v812 = vsub.f32 %v686, %v808
        %v813 = vsub.f32 %v689, %v809
        %v814 = vsub.f32 %v694, %v810
        %v815 = vsub.f32 %v697, %v811
        %v816 = vmul.f32 %v812, %v812
        %v817 = vmul.f32 %v813, %v813
        %v818 = vmul.f32 %v814, %v814
        %v819 = vmul.f32 %v815, %v815
        %824 = vrot.lane.b32.xlu0 %v816, 64
        %v825 = vpop.permute.xlu0 %824
        %826 = vrot.lane.b32.xlu0 %v817, 64
        %v827 = vpop.permute.xlu0 %826
        %828 = vrot.lane.b32.xlu0 %v818, 64
        %v829 = vpop.permute.xlu0 %828
        %830 = vrot.lane.b32.xlu0 %v819, 64
        %v831 = vpop.permute.xlu0 %830
        %v836 = vsel %vm702, %v825, 0.0
        %837 = vadd.xlane.f32.xlu0 %v836
        %v838 = vpop.xlane.xlu0 %837
        %v839 = vsel %vm702, %v827, 0.0
        %840 = vadd.xlane.f32.xlu0 %v839
        %v841 = vpop.xlane.xlu0 %840
        %v842 = vsel %vm702, %v829, 0.0
        %843 = vadd.xlane.f32.xlu0 %v842
        %v844 = vpop.xlane.xlu0 %843
        %v845 = vsel %vm702, %v831, 0.0
        %846 = vadd.xlane.f32.xlu0 %v845
        %v847 = vpop.xlane.xlu0 %846
        %v848 = vmul.f32 %v838, %v715
        %v849 = vmul.f32 %v841, %v715
        %v850 = vmul.f32 %v844, %v715
        %v851 = vmul.f32 %v847, %v715
        %v852 = vadd.f32 %v848, 1e-05
        %v853 = vadd.f32 %v849, 1e-05
        %v854 = vadd.f32 %v850, 1e-05
        %v855 = vadd.f32 %v851, 1e-05
        %v856 = vrsqrt.pop %v852
        %v857 = vrsqrt.pop %v853
        %v858 = vrsqrt.pop %v854
        %v859 = vrsqrt.pop %v855
        %v860 = vmul.f32 %v812, %v856
        %v861 = vmul.f32 %v813, %v857
        %v862 = vmul.f32 %v814, %v858
        %v863 = vmul.f32 %v815, %v859
        %v864 = vmul.f32 %v860, %v760
        %v865 = vmul.f32 %v861, %v760
        %v866 = vmul.f32 %v862, %v760
        %v867 = vmul.f32 %v863, %v760
        %v868 = vadd.f32 %v864, %v770
        %v869 = vadd.f32 %v865, %v770
        %v870 = vadd.f32 %v866, %v770
        %v871 = vadd.f32 %v867, %v770
        %v872 = vmax.f32 %v868, 0.0
        %v873 = vmax.f32 %v869, 0.0
        %v874 = vmax.f32 %v870, 0.0
        %v875 = vmax.f32 %v871, 0.0
        %v876 = vld [vmem:[%s8] sm:$0x1]
        %v878 = vlaneseq
        %v879 = vshrl.u32 %v878, 7
        %v880 = vsub.s32 0, %v879
        %v881 = vrot.slane %v876, %v880
        %v883 = vmul.f32 %v776, %v881
        %v884 = vmul.f32 %v777, %v881
        %v885 = vmul.f32 %v778, %v881
        %v886 = vmul.f32 %v779, %v881
        %v887 = vsel %vm702, %v883, 0.0
        %888 = vadd.xlane.f32.xlu0 %v887
        %v889 = vpop.xlane.xlu0 %888
        %v890 = vsel %vm702, %v884, 0.0
        %891 = vadd.xlane.f32.xlu0 %v890
        %v892 = vpop.xlane.xlu0 %891
        %v893 = vsel %vm702, %v885, 0.0
        %894 = vadd.xlane.f32.xlu0 %v893
        %v895 = vpop.xlane.xlu0 %894
        %v896 = vsel %vm702, %v886, 0.0
        %897 = vadd.xlane.f32.xlu0 %v896
        %v898 = vpop.xlane.xlu0 %897
        %v899 = vld [vmem:[#allocation2] sm:$0x1]
        %v901 = vlaneseq
        %v902 = vshrl.u32 %v901, 7
        %v903 = vsub.s32 0, %v902
        %v904 = vrot.slane %v899, %v903
        %v906 = vadd.f32 %v889, %v904
        %v907 = vadd.f32 %v892, %v904
        %v908 = vadd.f32 %v895, %v904
        %v909 = vadd.f32 %v898, %v904
        %v910 = vpack.c.bf16 %v873, %v872
        %v911 = vpack.c.bf16 %v875, %v874
        %v912 = vld [vmem:[#allocation11] sm:$0xf]
        %v913 = vld [vmem:[#allocation11 + $0x4] sm:$0xf]
        %v914 = vld [vmem:[#allocation11 + $0x8] sm:$0xf]
        %v915 = vld [vmem:[#allocation11 + $0xc] sm:$0xf]
        %v916 = vld [vmem:[#allocation11 + $0x10] sm:$0xf]
        %v917 = vld [vmem:[#allocation11 + $0x14] sm:$0xf]
        %v918 = vld [vmem:[#allocation11 + $0x18] sm:$0xf]
        %v919 = vld [vmem:[#allocation11 + $0x1c] sm:$0xf]
        %v920 = vld [vmem:[%s11] sm:$0x1]
        %v922 = vlaneseq
        %v923 = vshrl.u32 %v922, 7
        %v924 = vsub.s32 0, %v923
        %v925 = vrot.slane %v920, %v924
        %929 = vrot.lane.b32.xlu0 %v910, 64
        %v930 = vpop.permute.xlu0 %929
        %931 = vrot.lane.b32.xlu0 %v911, 64
        %v932 = vpop.permute.xlu0 %931
        %v941 = vunpack.c.l.b16 %v912
        %v942 = vunpack.c.l.b16 %v913
        %v943 = vunpack.c.l.b16 %v914
        %v944 = vunpack.c.l.b16 %v915
        %v945 = vunpack.c.l.b16 %v916
        %v946 = vunpack.c.l.b16 %v917
        %v947 = vunpack.c.l.b16 %v918
        %v948 = vunpack.c.l.b16 %v919
        %v949 = vpack.c.b16 %v942, %v941
        %v950 = vpack.c.b16 %v944, %v943
        %v951 = vpack.c.b16 %v946, %v945
        %v952 = vpack.c.b16 %v948, %v947
        %v958 = vsel %vm702, %v930, 0
        %v961 = vsel %vm702, %v932, 0
        %963 = vmatprep.subr.bf16.mxu0 0
        %964 = vmatpush1.bf16.msra.mxu0 0
        %965 = vmatprep.subr.bf16.mxu0 0
        %966 = vmatpush1.bf16.msra.mxu0 0
        %967 = vmatprep.subr.bf16.mxu0 0
        %968 = vmatpush1.bf16.msra.mxu0 0
        %969 = vmatprep.subr.bf16.mxu0 0
        %970 = vmatpush1.bf16.msra.mxu0 0
        %971 = vmatprep.subr.bf16.mxu0 0
        %972 = vmatpush1.bf16.msra.mxu0 %v952
        %973 = vmatprep.subr.bf16.mxu0 0
        %974 = vmatpush1.bf16.msra.mxu0 %v951
        %975 = vmatprep.subr.bf16.mxu0 0
        %976 = vmatpush1.bf16.msra.mxu0 %v950
        %977 = vmatprep.subr.bf16.mxu0 0
        %978 = vmatpush1.bf16.msra.mxu0 %v949
        %979 = vmatprep.subr.bf16.mxu0 0
        %980 = vmatpush2.bf16.msra.mxu0 0
        %981 = vmatprep.subr.bf16.mxu0 0
        %982 = vmatpush2.bf16.msra.mxu0 0
        %983 = vmatprep.subr.bf16.mxu0 0
        %984 = vmatpush2.bf16.msra.mxu0 0
        %985 = vmatprep.subr.bf16.mxu0 0
        %986 = vmatpush2.bf16.msra.mxu0 0
        %987 = vmatprep.subr.bf16.mxu0 0
        %988 = vmatpush2.bf16.msra.mxu0 0
        %989 = vmatprep.subr.bf16.mxu0 0
        %990 = vmatpush2.bf16.msra.mxu0 0
        %991 = vmatprep.subr.bf16.mxu0 0
        %992 = vmatpush2.bf16.msra.mxu0 0
        %993 = vmatprep.subr.bf16.mxu0 0
        %994 = vmatpush2.bf16.msra.mxu0 0
        %995 = vmatprep.mubr.bf16.mxu0 0
        %996 = vmatmul.mubr.bf16.gmra.mxu0 %v958
        %v997 = vpop.f32.mrf.mxu0
        %v998 = vadd.f32 %v925, %v997
        %v999 = vpop.f32.mrf.mxu0
        %v1000 = vpop.f32.mrf.mxu0
        %v1001 = vadd.f32 %v925, %v1000
        %v1002 = vpop.f32.mrf.mxu0
        %1003 = vmatprep.mubr.bf16.mxu0 0
        %1004 = vmatmul.mubr.bf16.gmra.mxu0 %v961
        %v1005 = vpop.f32.mrf.mxu0
        %v1006 = vadd.f32 %v925, %v1005
        %v1007 = vpop.f32.mrf.mxu0
        %v1008 = vpop.f32.mrf.mxu0
        %v1009 = vadd.f32 %v925, %v1008
        %v1010 = vpop.f32.mrf.mxu0
        %1011 = vdwg.mxu0
        %vm1012 = vcmask 7168
        %v1013 = vsel %vm1012, %v906, -inf
        %v1014 = vsel %vm1012, %v907, -inf
        %v1015 = vmax.f32 %v1013, %v1014
        %v1016 = vrot.slane %v1015, 4
        %v1017 = vmax.f32 %v1015, %v1016
        %v1018 = vrot.slane %v1017, 2
        %v1019 = vmax.f32 %v1017, %v1018
        %v1020 = vrot.slane %v1019, 1
        %v1021 = vmax.f32 %v1019, %v1020
        %v1022 = vsel %vm1012, %v908, -inf
        %v1023 = vsel %vm1012, %v909, -inf
        %v1024 = vmax.f32 %v1022, %v1023
        %v1025 = vrot.slane %v1024, 4
        %v1026 = vmax.f32 %v1024, %v1025
        %v1027 = vrot.slane %v1026, 2
        %v1028 = vmax.f32 %v1026, %v1027
        %v1029 = vrot.slane %v1028, 1
        %v1030 = vmax.f32 %v1028, %v1029
        %v1031 = vsub.f32 %v906, %v1021
        %v1032 = vsub.f32 %v907, %v1021
        %v1033 = vsub.f32 %v908, %v1030
        %v1034 = vsub.f32 %v909, %v1030
        %v1035 = vmul.f32 %v1031, 1.442695
        %v1036 = vpow.pop %v1035
        %v1037 = vmul.f32 %v1032, 1.442695
        %v1038 = vpow.pop %v1037
        %v1039 = vmul.f32 %v1033, 1.442695
        %v1040 = vpow.pop %v1039
        %v1041 = vmul.f32 %v1034, 1.442695
        %v1042 = vpow.pop %v1041
        %v1043 = vsel %vm1012, %v1036, 0.0
        %v1044 = vsel %vm1012, %v1038, 0.0
        %v1045 = vadd.f32 %v1043, %v1044
        %v1046 = vrot.slane %v1045, 4
        %v1047 = vadd.f32 %v1045, %v1046
        %v1048 = vrot.slane %v1047, 2
        %v1049 = vadd.f32 %v1047, %v1048
        %v1050 = vrot.slane %v1049, 1
        %v1051 = vadd.f32 %v1049, %v1050
        %v1052 = vsel %vm1012, %v1040, 0.0
        %v1053 = vsel %vm1012, %v1042, 0.0
        %v1054 = vadd.f32 %v1052, %v1053
        %v1055 = vrot.slane %v1054, 4
        %v1056 = vadd.f32 %v1054, %v1055
        %v1057 = vrot.slane %v1056, 2
        %v1058 = vadd.f32 %v1056, %v1057
        %v1059 = vrot.slane %v1058, 1
        %v1060 = vadd.f32 %v1058, %v1059
        %v1061 = vrcp.pop %v1051
        %v1062 = vrcp.pop %v1060
        %v1063 = vmul.f32 %v1036, %v1061
        %v1064 = vmul.f32 %v1038, %v1061
        %v1065 = vmul.f32 %v1040, %v1062
        %v1066 = vmul.f32 %v1042, %v1062
        %1068 = vset.pattern.permute.xlu0 0
        %1069 = vperm.xlu0 %1068, %v1063
        %v1070 = vpop.permute.xlu0 %1069
        %1073 = vset.pattern.permute.xlu0 0
        %1074 = vperm.xlu0 %1073, %v1064
        %v1075 = vpop.permute.xlu0 %1074
        %1078 = vset.pattern.permute.xlu0 0
        %1079 = vperm.xlu0 %1078, %v1065
        %v1080 = vpop.permute.xlu0 %1079
        %1083 = vset.pattern.permute.xlu0 0
        %1084 = vperm.xlu0 %1083, %v1066
        %v1085 = vpop.permute.xlu0 %1084
        %v1087 = vmul.f32 %v1070, %v998
        %v1088 = vmul.f32 %v1075, %v1001
        %v1089 = vmul.f32 %v1080, %v1006
        %v1090 = vmul.f32 %v1085, %v1009
        %v1091 = vadd.f32 %v1087, %v1088
        %v1092 = vrot.slane %v1091, 4
        %v1093 = vadd.f32 %v1091, %v1092
        %v1094 = vrot.slane %v1093, 2
        %v1095 = vadd.f32 %v1093, %v1094
        %v1096 = vrot.slane %v1095, 1
        %v1097 = vadd.f32 %v1095, %v1096
        %v1098 = vadd.f32 %v1089, %v1090
        %v1099 = vrot.slane %v1098, 4
        %v1100 = vadd.f32 %v1098, %v1099
        %v1101 = vrot.slane %v1100, 2
        %v1102 = vadd.f32 %v1100, %v1101
        %v1103 = vrot.slane %v1102, 1
        %v1104 = vadd.f32 %v1102, %v1103
        %vm1107 = vcmask 1041409
        %v1108 = vsel %vm1107, %v1104, %v1097
        %1110 = vst [vmem:[%s514] sm:$0x3] %v1108
        %s1111 = sand.u32 %s305, 1
        %s1112 = scalar_lea.sflag [#allocation5], %s1111
        %s1113 = sand.u32 %s305, 1
        %s1114 = smul.addr %s1113, 2
        %s1115 = scalar_lea.vmem [#allocation12], %s1114
        // Predicated region
        $region89: #{tpu_custom_call.1} parent=67 // pred_check
          %p1116 = pneg %p315
        $region90: #{tpu_custom_call.1} parent=67 // pred_check_branch
          %1118 = sbr.rel (%p1116) target = $region92
        $region91: #{tpu_custom_call.1} parent=67 // pred_region
          %s1120 = ssub.s32 32, 32
          %1121 = vsyncadd %s1112, %s1120
          %s1122 = smul.addr %s35, 32
          %s1123 = scalar_lea.hbm %s12, %s1122
          %s1125 = sshll.u32 %s1115, 4
          %s1126 = int_to_ptr.vmem [resolvable:$true] %s1125
          %1128 = dma.vmem_to_hbm [thread:$0]  %s1126, 32, %s1123, %s1112
        $region92: #{tpu_custom_call.1} parent=67 // pred_fallthru
          _
      $region68: #{tpu_custom_call.1} parent=5 // pred_fallthru
        _
      %p1129 = scmp.le.s32.totalorder 2, %s30
      // Predicated region
      $region93: #{tpu_custom_call.1} parent=5 // pred_check
        %p1130 = pneg %p1129
      $region94: #{tpu_custom_call.1} parent=5 // pred_check_branch
        %1132 = sbr.rel (%p1130) target = $region96
      $region95: #{tpu_custom_call.1} parent=5 // pred_region
        %s1133 = ssub.s32 %s30, 2
        // Predicated region
        $region97: #{tpu_custom_call.1} parent=95 // pred_check
          %p1134 = pneg %p321
        $region98: #{tpu_custom_call.1} parent=95 // pred_check_branch
          %1136 = sbr.rel (%p1134) target = $region100
        $region99: #{tpu_custom_call.1} parent=95 // pred_region
          %s1137 = sand.u32 %s306, 1
          %s1138 = scalar_lea.sflag [#allocation5], %s1137
          %s1139 = sand.u32 %s306, 1
          %s1140 = smul.addr %s1139, 2
          %s1141 = scalar_lea.vmem [#allocation12], %s1140
          %1142 = dma.done %s1138, 32
        $region100: #{tpu_custom_call.1} parent=95 // pred_fallthru
          _
      $region96: #{tpu_custom_call.1} parent=5 // pred_fallthru
        _
    $region6: #{tpu_custom_call.1} parent=1 // loop_footer
      %s34 = sadd.s32 1, %s30
    $region7: #{tpu_custom_call.1} parent=1 // loop_footer_branch
      %29 = sbr.rel target = $region3
    $region8: #{tpu_custom_call.1} parent=1 // loop_exit
      _
    %1143 = vsyncpa [#allocation4], 1
    %s1144 = scalar_lea.sflag [#allocation4], 1
    %1145 = vsyncpa %s1144, 1
    %1146 = vsyncpa [#allocation7], 1
    %s1147 = scalar_lea.sflag [#allocation7], 1
    %1148 = vsyncpa %s1147, 1
    %1149 = vsyncpa [#allocation10], 1
    %1150 = vsyncpa [#allocation5], 1
    %s1151 = scalar_lea.sflag [#allocation5], 1
    %1152 = vsyncpa %s1151, 1

</llo_original>
